<compile_context>
chip_gen: v6e
topology: v6e:2x2x1
jax: 0.10.0
libtpu: 0.0.40
codegen_flags: <defaults>
</compile_context>

<pallas_src>
import jax
import jax.numpy as jnp
from jax.experimental import pallas as pl
from jax.experimental.pallas import tpu as pltpu

# ---- hyperparameters implied by SlidingPredictor.__init__ / forward ----------
D_MODEL = 4          # conv in_channels (d_model)
OUT_DIM = 4          # final output dim
CONV_OUT = 8         # Conv1d(d_model, 8, kernel_size=3, stride=1)
CONV_K = 3
SLIDE_DMODEL = 16    # sliding_model(c_in=8, d_model=16, kernel=32, stride=1, out_dim=32)
SLIDE_KERNEL = 32
SLIDE_OUT = 32
L2_OUT = 16          # Linear(32, 16)
SEQ_LEN = 66                               # forced by linear2(32,16) acting on the seq axis
L_CONV = SEQ_LEN - (CONV_K - 1)            # 64
L_POOL = L_CONV - 1                        # 63  (MaxPool1d(2, 1))
N_WIN = L_POOL - SLIDE_KERNEL + 1          # 32  (sliding windows, stride 1)

NBATCH = 2                                 # lane-stacked batches (NBATCH * L_CONV == 128)
L_TOT = NBATCH * L_CONV                    # 128 total lanes of conv output
L_POOL_TOT = L_TOT - 1                     # 127 pooled lanes (lane 63 is cross-batch junk)

# ---- packed-parameter slab: (128, 128) f32, regions co-located in rows AND lanes ----
SLAB_ROWS = 128
SLAB_LANES = 128
COL_AVGT = 0                      # rows 0..126, lanes 0..63 : block-diag window-mean^T (row 63 = 0)
COL_WL2T = 64                     # rows 0..63,  lanes 64..95 : block-diag linear2^T   (64, 32)
COL_WOUTT = 96                    # rows 0..31,  lanes 96..103: block-diag out^T       (32, 8)
ROW_WCONV, COL_WCONV = 0, 104     # (8, 13)  [conv taps k0|k1|k2 | bias column]
ROW_W1T, COL_W1T = 8, 104         # (16, 8)  sliding stand-in linear(8->16), transposed
ROW_B1, COL_B1 = 8, 112           # (16, 1)  its bias, as a column
ROW_W2L1, COL_W2L1 = 24, 104      # (1, 16)  (w2 @ wl1)^T  -- folded sliding-head/linear1 weight
ROW_S0, COL_S0 = 24, 120          # (1, 1)   b2 @ wl1 + bl1 -- folded bias
ROW_BL2, COL_BL2 = 32, 96         # (1, 32)  [bl2 | bl2]
ROW_BOUT, COL_BOUT = 33, 96       # (1, 8)   [bout | bout]


def sliding_predictor_kernel(x_ref, w_ref, o_ref):
    # x_ref: (13, 128) conv-shift-stacked + lane-stacked input, last row = ones (bias fold)
    # w_ref: (128, 128) packed parameters (see layout constants above)
    # o_ref: (1, NBATCH*OUT_DIM) lane-dense output row [batch0 | batch1]
    xs = x_ref[...]                                                            # (13, 128)

    wconv = w_ref[ROW_WCONV:ROW_WCONV + CONV_OUT,
                  COL_WCONV:COL_WCONV + CONV_K * D_MODEL + 1]                  # (8, 13)
    w1t   = w_ref[ROW_W1T:ROW_W1T + SLIDE_DMODEL, COL_W1T:COL_W1T + CONV_OUT]  # (16, 8)
    b1    = w_ref[ROW_B1:ROW_B1 + SLIDE_DMODEL, COL_B1:COL_B1 + 1]             # (16, 1)
    w2l1t = w_ref[ROW_W2L1:ROW_W2L1 + 1, COL_W2L1:COL_W2L1 + SLIDE_DMODEL]     # (1, 16)
    s0    = w_ref[ROW_S0:ROW_S0 + 1, COL_S0:COL_S0 + 1]                        # (1, 1)
    avgt  = w_ref[0:L_POOL_TOT, COL_AVGT:COL_AVGT + NBATCH * N_WIN]            # (127, 64)
    wl2t  = w_ref[0:NBATCH * SLIDE_OUT, COL_WL2T:COL_WL2T + NBATCH * L2_OUT]   # (64, 32)
    woutt = w_ref[0:NBATCH * L2_OUT, COL_WOUTT:COL_WOUTT + NBATCH * OUT_DIM]   # (32, 8)
    bl2   = w_ref[ROW_BL2:ROW_BL2 + 1, COL_BL2:COL_BL2 + NBATCH * L2_OUT]      # (1, 32)
    bout  = w_ref[ROW_BOUT:ROW_BOUT + 1, COL_BOUT:COL_BOUT + NBATCH * OUT_DIM] # (1, 8)

    # --- Conv1d(d_model -> 8, k=3, stride=1) + bias, one MXU pass (bias folded via ones row)
    y = jnp.dot(wconv, xs, preferred_element_type=jnp.float32)                 # (8, 128)

    # --- MaxPool1d(2, 1) over time (lanes), then ReLU.  Lane 63 mixes the two batches but is
    #     annihilated by the zero row 63 of the block-diagonal window-mean matrix downstream.
    z = jnp.maximum(jnp.maximum(y[:, :L_POOL_TOT], y[:, 1:]), 0.0)             # (8, 127)

    # --- sliding_net1 stand-in, step 1: linear(8 -> 16) + ReLU (single b1 broadcast, no unroll)
    # TODO(synk): sliding_model is an externally injected nn.Module (unspecified); stand-in =
    # linear(8->16)+ReLU, mean over sliding windows (kernel=32, stride=1), linear(16->32);
    # dropout is a no-op at inference.
    h = jnp.maximum(jnp.dot(w1t, z, preferred_element_type=jnp.float32) + b1, 0.0)   # (16, 127)

    # --- folded [linear(16->32); window-mean; linear1(32->1); ReLU], both batches at once:
    #     u = relu(avg_blockdiag @ (h @ (w2 @ wl1)) + (b2 @ wl1 + bl1))   (exact linear fold)
    hp = jnp.dot(w2l1t, h, preferred_element_type=jnp.float32)                 # (1, 127)
    u = jnp.maximum(jnp.dot(hp, avgt, preferred_element_type=jnp.float32) + s0, 0.0)  # (1, 64)

    # --- linear2(32 -> 16) + ReLU via block-diagonal weight (no cross-batch mixing) ---------
    v = jnp.maximum(jnp.dot(u, wl2t, preferred_element_type=jnp.float32) + bl2, 0.0)  # (1, 32)

    # --- out(16 -> out_dim) via block-diagonal weight -> [batch0 out | batch1 out] ---------
    o_ref[...] = jnp.dot(v, woutt, preferred_element_type=jnp.float32) + bout          # (1, 8)


def pack_params(params):
    """Fold, transpose and pack all parameters (plus the constant block-diagonal
    window-mean matrix) into a single dense (128, 128) f32 slab -> one small weight DMA."""
    (wc, bc, w1, b1, w2, b2, wl1, bl1, wl2, bl2, wout, bout) = params

    w_all = jnp.concatenate([wc[k].T for k in range(CONV_K)], axis=1)          # (8, 12)
    wconv_ext = jnp.concatenate([w_all, bc.T], axis=1)                         # (8, 13) bias folded
    w2l1 = w2 @ wl1                                                            # (16, 1)
    s0 = b2 @ wl1 + bl1                                                        # (1, 1)

    r = jnp.arange(N_WIN)[:, None]
    c = jnp.arange(L_POOL)[None, :]
    avg = jnp.where((c >= r) & (c < r + SLIDE_KERNEL),
                    1.0 / SLIDE_KERNEL, 0.0).astype(jnp.float32)               # (32, 63)
    avgt = avg.T                                                               # (63, 32)

    slab = jnp.zeros((SLAB_ROWS, SLAB_LANES), jnp.float32)

    def put(s, row, col, m):
        return s.at[row:row + m.shape[0], col:col + m.shape[1]].set(m)

    # block-diagonal window-mean^T: batch0 -> rows 0..62 / lanes 0..31,
    #                               batch1 -> rows 64..126 / lanes 32..63; row 63 stays zero.
    slab = put(slab, 0, COL_AVGT, avgt)
    slab = put(slab, L_CONV, COL_AVGT + N_WIN, avgt)
    # block-diagonal linear2^T (32,16 per batch)
    slab = put(slab, 0, COL_WL2T, wl2.T)
    slab = put(slab, SLIDE_OUT, COL_WL2T + L2_OUT, wl2.T)
    # block-diagonal out^T (16,4 per batch)
    slab = put(slab, 0, COL_WOUTT, wout.T)
    slab = put(slab, L2_OUT, COL_WOUTT + OUT_DIM, wout.T)
    # small tensors, co-located in lanes 96..127
    slab = put(slab, ROW_WCONV, COL_WCONV, wconv_ext)                          # (8, 13)
    slab = put(slab, ROW_W1T, COL_W1T, w1.T)                                   # (16, 8)
    slab = put(slab, ROW_B1, COL_B1, b1.T)                                     # (16, 1)
    slab = put(slab, ROW_W2L1, COL_W2L1, w2l1.T)                               # (1, 16)
    slab = put(slab, ROW_S0, COL_S0, s0)                                       # (1, 1)
    slab = put(slab, ROW_BL2, COL_BL2, jnp.tile(bl2.T, (1, NBATCH)))           # (1, 32)
    slab = put(slab, ROW_BOUT, COL_BOUT, jnp.tile(bout.T, (1, NBATCH)))        # (1, 8)
    return slab


@jax.jit
def sliding_predictor(x, slab):
    """x: (NBATCH, SEQ_LEN, D_MODEL) f32, slab: packed params -> (NBATCH, OUT_DIM, 1) f32."""
    assert x.shape[0] == NBATCH, "lane-stacked kernel is built for B == 2 (B*L_CONV == 128)"
    # Layout plumbing (cheap, fused by XLA, outside the kernel): channels-first, stack the 3
    # conv shifts along channels, lane-stack the batches, append a ones row for the bias fold.
    x_ct = jnp.swapaxes(x, 1, 2)                                               # (B, 4, 66)
    x_sh = jnp.concatenate([x_ct[:, :, k:k + L_CONV] for k in range(CONV_K)],
                           axis=1)                                             # (B, 12, 64)
    x_ls = jnp.swapaxes(x_sh, 0, 1).reshape(CONV_K * D_MODEL, L_TOT)           # (12, 128)
    x_in = jnp.concatenate([x_ls, jnp.ones((1, L_TOT), x_ls.dtype)], axis=0)   # (13, 128)

    vmem = pl.BlockSpec(memory_space=pltpu.MemorySpace.VMEM)
    out_row = pl.pallas_call(
        sliding_predictor_kernel,
        out_shape=jax.ShapeDtypeStruct((1, NBATCH * OUT_DIM), jnp.float32),
        in_specs=[vmem, vmem],
        out_specs=vmem,
    )(x_in, slab)
    # NOTE: for B > 2, add a leading batch grid axis (blocks of 2) with
    # dimension_semantics=("parallel", ...) so v7x's two TensorCores split the batch;
    # for B <= 2 a single grid=() invocation minimizes fixed overhead.
    return out_row.reshape(NBATCH, OUT_DIM)[:, :, None]                        # (B, OUT_DIM, 1)


def reference(x, params):
    """Pure-JAX reference mirroring the PyTorch forward (with the same stand-in)."""
    (wc, bc, w1, b1, w2, b2, wl1, bl1, wl2, bl2, wout, bout) = params
    y = (x[:, 0:L_CONV, :] @ wc[0] + x[:, 1:1 + L_CONV, :] @ wc[1]
         + x[:, 2:2 + L_CONV, :] @ wc[2] + bc[None])
    z = jnp.maximum(jnp.maximum(y[:, 0:L_POOL, :], y[:, 1:1 + L_POOL, :]), 0.0)
    h = jnp.maximum(z @ w1 + b1[None], 0.0)
    rows = jnp.arange(N_WIN)[:, None]
    cols = jnp.arange(L_POOL)[None, :]
    avg = jnp.where((cols >= rows) & (cols < rows + SLIDE_KERNEL),
                    1.0 / SLIDE_KERNEL, 0.0).astype(jnp.float32)
    w = jnp.einsum("wl,bld->bwd", avg, h)
    s = w @ w2 + b2[None]
    u = jnp.maximum(s @ wl1 + bl1[None], 0.0)                  # (B, 32, 1)
    ut = jnp.swapaxes(u, 1, 2)                                 # (B, 1, 32)
    v = jnp.maximum(ut @ jnp.swapaxes(wl2, 0, 1) + bl2[:, 0][None, None, :], 0.0)
    o = v @ jnp.swapaxes(wout, 0, 1) + bout[:, 0][None, None, :]
    return jnp.swapaxes(o, -1, -2)                             # (B, OUT_DIM, 1)


if __name__ == "__main__":
    B = NBATCH
    keys = jax.random.split(jax.random.PRNGKey(0), 16)
    x = jax.random.normal(keys[0], (B, SEQ_LEN, D_MODEL), jnp.float32)

    # ---- deterministic parameter init (torch-convention shapes, then remapped) ----
    conv_w = 0.1 * jax.random.normal(keys[1], (CONV_OUT, D_MODEL, CONV_K), jnp.float32)
    conv_b = 0.1 * jax.random.normal(keys[2], (CONV_OUT,), jnp.float32)
    wc = jnp.transpose(conv_w, (2, 1, 0))                      # (K, D_MODEL, CONV_OUT)
    bc = conv_b.reshape(1, CONV_OUT)

    w1 = 0.1 * jax.random.normal(keys[3], (CONV_OUT, SLIDE_DMODEL), jnp.float32)
    b1 = (0.1 * jax.random.normal(keys[4], (SLIDE_DMODEL,), jnp.float32)).reshape(1, -1)
    w2 = 0.1 * jax.random.normal(keys[5], (SLIDE_DMODEL, SLIDE_OUT), jnp.float32)
    b2 = (0.1 * jax.random.normal(keys[6], (SLIDE_OUT,), jnp.float32)).reshape(1, -1)

    l1_w = 0.1 * jax.random.normal(keys[7], (1, SLIDE_OUT), jnp.float32)       # torch (1, 32)
    l1_b = 0.1 * jax.random.normal(keys[8], (1,), jnp.float32)
    wl1 = jnp.transpose(l1_w)                                  # (32, 1)
    bl1 = l1_b.reshape(1, 1)

    l2_w = 0.1 * jax.random.normal(keys[9], (L2_OUT, SLIDE_OUT), jnp.float32)  # torch (16, 32)
    l2_b = 0.1 * jax.random.normal(keys[10], (L2_OUT,), jnp.float32)
    wl2 = l2_w
    bl2 = l2_b.reshape(L2_OUT, 1)

    out_w = 0.1 * jax.random.normal(keys[11], (OUT_DIM, L2_OUT), jnp.float32)  # torch (out, 16)
    out_b = 0.1 * jax.random.normal(keys[12], (OUT_DIM,), jnp.float32)
    wout = out_w
    bout = out_b.reshape(OUT_DIM, 1)

    params = (wc, bc, w1, b1, w2, b2, wl1, bl1, wl2, bl2, wout, bout)
    slab = pack_params(params)

    out = sliding_predictor(x, slab)
    out = jax.block_until_ready(out)

    assert out.shape == (B, OUT_DIM, 1), out.shape
    ref = reference(x, params)
    assert jnp.allclose(out, ref, atol=1e-3, rtol=1e-3), float(jnp.max(jnp.abs(out - ref)))
    print("KERNEL_OK")
</pallas_src>

<mosaic_0001>
module attributes {stable_mosaic.version = 11 : i64} {
  func.func @sliding_predictor_kernel(%arg0: memref<13x128xf32, #tpu.memory_space<vmem>>, %arg1: memref<128x128xf32, #tpu.memory_space<vmem>>, %arg2: memref<1x8xf32, #tpu.memory_space<vmem>>) attributes {dimension_semantics = [], scalar_prefetch = 0 : i64, scratch_operands = 0 : i64, tpu.core_type = #tpu.core_type<tc>} {
    %c0 = arith.constant 0 : index
    %c0_0 = arith.constant 0 : index
    %0 = vector.load %arg0[%c0, %c0_0] : memref<13x128xf32, #tpu.memory_space<vmem>>, vector<13x128xf32>
    %c0_1 = arith.constant 0 : index
    %c104 = arith.constant 104 : index
    %1 = vector.load %arg1[%c0_1, %c104] : memref<128x128xf32, #tpu.memory_space<vmem>>, vector<8x13xf32>
    %c8 = arith.constant 8 : index
    %c104_2 = arith.constant 104 : index
    %2 = vector.load %arg1[%c8, %c104_2] : memref<128x128xf32, #tpu.memory_space<vmem>>, vector<16x8xf32>
    %c8_3 = arith.constant 8 : index
    %c112 = arith.constant 112 : index
    %3 = vector.load %arg1[%c8_3, %c112] : memref<128x128xf32, #tpu.memory_space<vmem>>, vector<16x1xf32>
    %c24 = arith.constant 24 : index
    %c104_4 = arith.constant 104 : index
    %4 = vector.load %arg1[%c24, %c104_4] : memref<128x128xf32, #tpu.memory_space<vmem>>, vector<1x16xf32>
    %c24_5 = arith.constant 24 : index
    %c120 = arith.constant 120 : index
    %5 = vector.load %arg1[%c24_5, %c120] : memref<128x128xf32, #tpu.memory_space<vmem>>, vector<1x1xf32>
    %c0_6 = arith.constant 0 : index
    %c0_7 = arith.constant 0 : index
    %6 = vector.load %arg1[%c0_6, %c0_7] : memref<128x128xf32, #tpu.memory_space<vmem>>, vector<127x64xf32>
    %c0_8 = arith.constant 0 : index
    %c64 = arith.constant 64 : index
    %7 = vector.load %arg1[%c0_8, %c64] : memref<128x128xf32, #tpu.memory_space<vmem>>, vector<64x32xf32>
    %c0_9 = arith.constant 0 : index
    %c96 = arith.constant 96 : index
    %8 = vector.load %arg1[%c0_9, %c96] : memref<128x128xf32, #tpu.memory_space<vmem>>, vector<32x8xf32>
    %c32 = arith.constant 32 : index
    %c96_10 = arith.constant 96 : index
    %9 = vector.load %arg1[%c32, %c96_10] : memref<128x128xf32, #tpu.memory_space<vmem>>, vector<1x32xf32>
    %c33 = arith.constant 33 : index
    %c96_11 = arith.constant 96 : index
    %10 = vector.load %arg1[%c33, %c96_11] : memref<128x128xf32, #tpu.memory_space<vmem>>, vector<1x8xf32>
    %cst = arith.constant dense<0.000000e+00> : vector<8x128xf32>
    %11 = tpu.matmul %1, %0, %cst {dimension_numbers = #tpu.dot_dimension_numbers<[1], [0], [0], [1], [0, 0, 1, 1], [], []>} : vector<8x13xf32>, vector<13x128xf32>, vector<8x128xf32> -> vector<8x128xf32>
    %12 = vector.extract_strided_slice %11 {offsets = [0, 0], sizes = [8, 127], strides = [1, 1]} : vector<8x128xf32> to vector<8x127xf32>
    %13 = vector.extract_strided_slice %11 {offsets = [0, 1], sizes = [8, 127], strides = [1, 1]} : vector<8x128xf32> to vector<8x127xf32>
    %14 = arith.maximumf %12, %13 : vector<8x127xf32>
    %cst_12 = arith.constant 0.000000e+00 : f32
    %15 = vector.broadcast %cst_12 : f32 to vector<8x127xf32>
    %16 = arith.maximumf %14, %15 : vector<8x127xf32>
    %cst_13 = arith.constant dense<0.000000e+00> : vector<16x127xf32>
    %17 = tpu.matmul %2, %16, %cst_13 {dimension_numbers = #tpu.dot_dimension_numbers<[1], [0], [0], [1], [0, 0, 1, 1], [], []>} : vector<16x8xf32>, vector<8x127xf32>, vector<16x127xf32> -> vector<16x127xf32>
    %18 = vector.broadcast %3 : vector<16x1xf32> to vector<16x127xf32>
    %19 = arith.addf %17, %18 : vector<16x127xf32>
    %cst_14 = arith.constant 0.000000e+00 : f32
    %20 = vector.broadcast %cst_14 : f32 to vector<16x127xf32>
    %21 = arith.maximumf %19, %20 : vector<16x127xf32>
    %cst_15 = arith.constant dense<0.000000e+00> : vector<1x127xf32>
    %22 = tpu.matmul %4, %21, %cst_15 {dimension_numbers = #tpu.dot_dimension_numbers<[1], [0], [0], [1], [0, 0, 1, 1], [], []>} : vector<1x16xf32>, vector<16x127xf32>, vector<1x127xf32> -> vector<1x127xf32>
    %cst_16 = arith.constant dense<0.000000e+00> : vector<1x64xf32>
    %23 = tpu.matmul %22, %6, %cst_16 {dimension_numbers = #tpu.dot_dimension_numbers<[1], [0], [0], [1], [0, 0, 1, 1], [], []>} : vector<1x127xf32>, vector<127x64xf32>, vector<1x64xf32> -> vector<1x64xf32>
    %24 = vector.broadcast %5 : vector<1x1xf32> to vector<1x64xf32>
    %25 = arith.addf %23, %24 : vector<1x64xf32>
    %cst_17 = arith.constant 0.000000e+00 : f32
    %26 = vector.broadcast %cst_17 : f32 to vector<1x64xf32>
    %27 = arith.maximumf %25, %26 : vector<1x64xf32>
    %cst_18 = arith.constant dense<0.000000e+00> : vector<1x32xf32>
    %28 = tpu.matmul %27, %7, %cst_18 {dimension_numbers = #tpu.dot_dimension_numbers<[1], [0], [0], [1], [0, 0, 1, 1], [], []>} : vector<1x64xf32>, vector<64x32xf32>, vector<1x32xf32> -> vector<1x32xf32>
    %29 = arith.addf %28, %9 : vector<1x32xf32>
    %cst_19 = arith.constant 0.000000e+00 : f32
    %30 = vector.broadcast %cst_19 : f32 to vector<1x32xf32>
    %31 = arith.maximumf %29, %30 : vector<1x32xf32>
    %cst_20 = arith.constant dense<0.000000e+00> : vector<1x8xf32>
    %32 = tpu.matmul %31, %8, %cst_20 {dimension_numbers = #tpu.dot_dimension_numbers<[1], [0], [0], [1], [0, 0, 1, 1], [], []>} : vector<1x32xf32>, vector<32x8xf32>, vector<1x8xf32> -> vector<1x8xf32>
    %33 = arith.addf %32, %10 : vector<1x8xf32>
    %c0_21 = arith.constant 0 : index
    %c0_22 = arith.constant 0 : index
    %34 = vector.load %arg2[%c0_21, %c0_22] : memref<1x8xf32, #tpu.memory_space<vmem>>, vector<1x8xf32>
    tpu.vector_store %arg2[%c0_21, %c0_22], %33 {strides = array<i32>} : memref<1x8xf32, #tpu.memory_space<vmem>>, vector<1x8xf32>,
    return
  }
}

</mosaic_0001>

<llo_original>
// kernel: sliding_predictor.1
$region0: #{sliding_predictor.1}
  #allocation0 [shape = 'u32[]', space=smem, size = 0x4, offset = 0x4, fixed_abs, tag = 'smem constant byte address 0x4 - core index']
  #allocation1 [shape = 'u32[144,128]{1,0:T(1,128)}', space=vmem, size = 0x12000, scoped, tag = 'internal scratch']
  %s0 = inlined_call_operand.vmem [shape: f32[13,128], index: 0, kind: input, shape index: {}]
  %s1 = inlined_call_operand.vmem [shape: f32[128,128], index: 1, kind: input, shape index: {}]
  %s2 = inlined_call_operand.vmem [shape: f32[1,8], index: 2, kind: output, shape index: {}]
  %s3 = sld [smem:[#allocation0]]
  $region18: #{sliding_predictor.1} parent=0
    _
  %s5 = ssub.s32 1, %s3
  %s6 = scalar_select 0, %s5, %s3
  // Predicated region
  $region2: #{sliding_predictor.1} parent=0 // pred_check
    _
  $region3: #{sliding_predictor.1} parent=0 // pred_check_branch
    %8 = sbr.rel (0) target = $region5
  $region4: #{sliding_predictor.1} parent=0 // pred_region
    _
  $region5: #{sliding_predictor.1} parent=0 // pred_fallthru
    _
  // Predicated region
  $region6: #{sliding_predictor.1} parent=0 // pred_check
    _
  $region7: #{sliding_predictor.1} parent=0 // pred_check_branch
    %10 = sbr.rel (0) target = $region9
  $region8: #{sliding_predictor.1} parent=0 // pred_region
    _
  $region9: #{sliding_predictor.1} parent=0 // pred_fallthru
    _
  %v11 = vld [vmem:[%s0] sm:$0xff]
  %v12 = vld [vmem:[%s0 + $0x8] sm:$0x1f]
  %v13 = vld [vmem:[%s1] sm:$0xff]
  %v14 = vld [vmem:[%s1 + $0x8] sm:$0xff]
  %v15 = vld [vmem:[%s1 + $0x10] sm:$0xff]
  %v16 = vld [vmem:[%s1 + $0x18] sm:$0x1]
  %v17 = vld [vmem:[%s1 + $0x18] sm:$0xff]
  %v18 = vld [vmem:[%s1 + $0x20] sm:$0xff]
  %v19 = vld [vmem:[%s1 + $0x28] sm:$0xff]
  %v20 = vld [vmem:[%s1 + $0x30] sm:$0xff]
  %v21 = vld [vmem:[%s1 + $0x38] sm:$0xff]
  %v22 = vld [vmem:[%s1 + $0x40] sm:$0xff]
  %v23 = vld [vmem:[%s1 + $0x48] sm:$0xff]
  %v24 = vld [vmem:[%s1 + $0x50] sm:$0xff]
  %v25 = vld [vmem:[%s1 + $0x58] sm:$0xff]
  %v26 = vld [vmem:[%s1 + $0x60] sm:$0xff]
  %v27 = vld [vmem:[%s1 + $0x68] sm:$0xff]
  %v28 = vld [vmem:[%s1 + $0x70] sm:$0xff]
  %v29 = vld [vmem:[%s1 + $0x78] sm:$0x7f]
  %v30 = vld [vmem:[%s1 + $0x20] sm:$0x1]
  %v31 = vld [vmem:[%s1 + $0x21] sm:$0x1]
  %33 = vrot.lane.b32.xlu0 %v13, 24
  %v34 = vpop.permute.xlu0 %33
  %vm35 = vcmask 105472
  %v36 = vsel %vm35, %v34, 0
  %vm38 = vcmask 1044480
  %v40 = vsel %vm38, %v12, 0
  %42 = vmatprep.subr.mxu0 0.0
  %43 = vmatpush1.msra.mxu0 0.0
  %44 = vmatprep.subr.mxu0 0.0
  %45 = vmatpush1.msra.mxu0 0.0
  %46 = vmatprep.subr.mxu0 0.0
  %47 = vmatpush1.msra.mxu0 0.0
  %48 = vmatprep.subr.mxu0 0.0
  %49 = vmatpush1.msra.mxu0 0.0
  %50 = vmatprep.subr.mxu0 0.0
  %51 = vmatpush1.msra.mxu0 0.0
  %52 = vmatprep.subr.mxu0 0.0
  %53 = vmatpush1.msra.mxu0 0.0
  %54 = vmatprep.subr.mxu0 0.0
  %55 = vmatpush1.msra.mxu0 0.0
  %56 = vmatprep.subr.mxu0 0.0
  %57 = vmatpush1.msra.mxu0 0.0
  %58 = vmatprep.subr.mxu0 0.0
  %59 = vmatpush1.msra.mxu0 0.0
  %60 = vmatprep.subr.mxu0 0.0
  %61 = vmatpush1.msra.mxu0 0.0
  %62 = vmatprep.subr.mxu0 0.0
  %63 = vmatpush1.msra.mxu0 0.0
  %64 = vmatprep.subr.mxu0 0.0
  %65 = vmatpush1.msra.mxu0 0.0
  %66 = vmatprep.subr.mxu0 0.0
  %67 = vmatpush1.msra.mxu0 0.0
  %68 = vmatprep.subr.mxu0 0.0
  %69 = vmatpush1.msra.mxu0 0.0
  %70 = vmatprep.subr.mxu0 0.0
  %71 = vmatpush1.msra.mxu0 %v40
  %72 = vmatprep.subr.mxu0 0.0
  %73 = vmatpush1.msra.mxu0 %v11
  %74 = vmatprep.subr.mxu0 0.0
  %75 = vmatpush2.msra.mxu0 0.0
  %76 = vmatprep.subr.mxu0 0.0
  %77 = vmatpush2.msra.mxu0 0.0
  %78 = vmatprep.subr.mxu0 0.0
  %79 = vmatpush2.msra.mxu0 0.0
  %80 = vmatprep.subr.mxu0 0.0
  %81 = vmatpush2.msra.mxu0 0.0
  %82 = vmatprep.subr.mxu0 0.0
  %83 = vmatpush2.msra.mxu0 0.0
  %84 = vmatprep.subr.mxu0 0.0
  %85 = vmatpush2.msra.mxu0 0.0
  %86 = vmatprep.subr.mxu0 0.0
  %87 = vmatpush2.msra.mxu0 0.0
  %88 = vmatprep.subr.mxu0 0.0
  %89 = vmatpush2.msra.mxu0 0.0
  %90 = vmatprep.subr.mxu0 0.0
  %91 = vmatpush2.msra.mxu0 0.0
  %92 = vmatprep.subr.mxu0 0.0
  %93 = vmatpush2.msra.mxu0 0.0
  %94 = vmatprep.subr.mxu0 0.0
  %95 = vmatpush2.msra.mxu0 0.0
  %96 = vmatprep.subr.mxu0 0.0
  %97 = vmatpush2.msra.mxu0 0.0
  %98 = vmatprep.subr.mxu0 0.0
  %99 = vmatpush2.msra.mxu0 0.0
  %100 = vmatprep.subr.mxu0 0.0
  %101 = vmatpush2.msra.mxu0 0.0
  %102 = vmatprep.subr.mxu0 0.0
  %103 = vmatpush2.msra.mxu0 0.0
  %104 = vmatprep.subr.mxu0 0.0
  %105 = vmatpush2.msra.mxu0 0.0
  %106 = vmatprep.mubr.f32.mxu0 0.0
  %107 = vmatmul.mubr.f32.gmra.mxu0 %v36
  %v108 = vpop.f32.mrf.mxu0
  %v109 = vadd.f32 0.0, %v108
  %v110 = vpop.f32.mrf.mxu0
  %111 = vdwg.mxu0
  %113 = vrot.lane.b32.xlu0 %v109, 127
  %v114 = vpop.permute.xlu0 %113
  %v116 = vmax.f32 %v109, %v114
  %v117 = vmax.f32 %v116, 0.0
  %119 = vset.pattern.permute.xlu0 112
  %120 = vperm.xlu0 %119, %v14
  %v121 = vpop.permute.xlu0 %120
  %124 = vset.pattern.permute.xlu0 112
  %125 = vperm.xlu0 %124, %v15
  %v126 = vpop.permute.xlu0 %125
  %128 = vrot.lane.b32.xlu0 %v14, 24
  %v129 = vpop.permute.xlu0 %128
  %130 = vrot.lane.b32.xlu0 %v15, 24
  %v131 = vpop.permute.xlu0 %130
  %vm132 = vcmask 64512
  %v133 = vsel %vm132, %v129, 0
  %v135 = vsel %vm132, %v131, 0
  %137 = vmatprep.subr.mxu0 0.0
  %138 = vmatpush1.msra.mxu0 0.0
  %139 = vmatprep.subr.mxu0 0.0
  %140 = vmatpush1.msra.mxu0 0.0
  %141 = vmatprep.subr.mxu0 0.0
  %142 = vmatpush1.msra.mxu0 0.0
  %143 = vmatprep.subr.mxu0 0.0
  %144 = vmatpush1.msra.mxu0 0.0
  %145 = vmatprep.subr.mxu0 0.0
  %146 = vmatpush1.msra.mxu0 0.0
  %147 = vmatprep.subr.mxu0 0.0
  %148 = vmatpush1.msra.mxu0 0.0
  %149 = vmatprep.subr.mxu0 0.0
  %150 = vmatpush1.msra.mxu0 0.0
  %151 = vmatprep.subr.mxu0 0.0
  %152 = vmatpush1.msra.mxu0 0.0
  %153 = vmatprep.subr.mxu0 0.0
  %154 = vmatpush1.msra.mxu0 0.0
  %155 = vmatprep.subr.mxu0 0.0
  %156 = vmatpush1.msra.mxu0 0.0
  %157 = vmatprep.subr.mxu0 0.0
  %158 = vmatpush1.msra.mxu0 0.0
  %159 = vmatprep.subr.mxu0 0.0
  %160 = vmatpush1.msra.mxu0 0.0
  %161 = vmatprep.subr.mxu0 0.0
  %162 = vmatpush1.msra.mxu0 0.0
  %163 = vmatprep.subr.mxu0 0.0
  %164 = vmatpush1.msra.mxu0 0.0
  %165 = vmatprep.subr.mxu0 0.0
  %166 = vmatpush1.msra.mxu0 0.0
  %167 = vmatprep.subr.mxu0 0.0
  %168 = vmatpush1.msra.mxu0 %v117
  %169 = vmatprep.subr.mxu0 0.0
  %170 = vmatpush2.msra.mxu0 0.0
  %171 = vmatprep.subr.mxu0 0.0
  %172 = vmatpush2.msra.mxu0 0.0
  %173 = vmatprep.subr.mxu0 0.0
  %174 = vmatpush2.msra.mxu0 0.0
  %175 = vmatprep.subr.mxu0 0.0
  %176 = vmatpush2.msra.mxu0 0.0
  %177 = vmatprep.subr.mxu0 0.0
  %178 = vmatpush2.msra.mxu0 0.0
  %179 = vmatprep.subr.mxu0 0.0
  %180 = vmatpush2.msra.mxu0 0.0
  %181 = vmatprep.subr.mxu0 0.0
  %182 = vmatpush2.msra.mxu0 0.0
  %183 = vmatprep.subr.mxu0 0.0
  %184 = vmatpush2.msra.mxu0 0.0
  %185 = vmatprep.subr.mxu0 0.0
  %186 = vmatpush2.msra.mxu0 0.0
  %187 = vmatprep.subr.mxu0 0.0
  %188 = vmatpush2.msra.mxu0 0.0
  %189 = vmatprep.subr.mxu0 0.0
  %190 = vmatpush2.msra.mxu0 0.0
  %191 = vmatprep.subr.mxu0 0.0
  %192 = vmatpush2.msra.mxu0 0.0
  %193 = vmatprep.subr.mxu0 0.0
  %194 = vmatpush2.msra.mxu0 0.0
  %195 = vmatprep.subr.mxu0 0.0
  %196 = vmatpush2.msra.mxu0 0.0
  %197 = vmatprep.subr.mxu0 0.0
  %198 = vmatpush2.msra.mxu0 0.0
  %199 = vmatprep.subr.mxu0 0.0
  %200 = vmatpush2.msra.mxu0 0.0
  %201 = vmatprep.mubr.f32.mxu0 0.0
  %202 = vmatmul.mubr.f32.gmra.mxu0 %v133
  %v203 = vpop.f32.mrf.mxu0
  %v204 = vadd.f32 %v121, %v203
  %v205 = vpop.f32.mrf.mxu0
  %206 = vmatprep.mubr.f32.mxu0 0.0
  %207 = vmatmul.mubr.f32.gmra.mxu0 %v135
  %v208 = vpop.f32.mrf.mxu0
  %v209 = vadd.f32 %v126, %v208
  %v210 = vpop.f32.mrf.mxu0
  %211 = vdwg.mxu0
  %v212 = vmax.f32 %v204, 0.0
  %v213 = vmax.f32 %v209, 0.0
  %215 = vrot.lane.b32.xlu0 %v16, 24
  %v216 = vpop.permute.xlu0 %215
  %vm217 = vcmask 130048
  %v218 = vsel %vm217, %v216, 0
  %220 = vmatprep.subr.mxu0 0.0
  %221 = vmatpush1.msra.mxu0 0.0
  %222 = vmatprep.subr.mxu0 0.0
  %223 = vmatpush1.msra.mxu0 0.0
  %224 = vmatprep.subr.mxu0 0.0
  %225 = vmatpush1.msra.mxu0 0.0
  %226 = vmatprep.subr.mxu0 0.0
  %227 = vmatpush1.msra.mxu0 0.0
  %228 = vmatprep.subr.mxu0 0.0
  %229 = vmatpush1.msra.mxu0 0.0
  %230 = vmatprep.subr.mxu0 0.0
  %231 = vmatpush1.msra.mxu0 0.0
  %232 = vmatprep.subr.mxu0 0.0
  %233 = vmatpush1.msra.mxu0 0.0
  %234 = vmatprep.subr.mxu0 0.0
  %235 = vmatpush1.msra.mxu0 0.0
  %236 = vmatprep.subr.mxu0 0.0
  %237 = vmatpush1.msra.mxu0 0.0
  %238 = vmatprep.subr.mxu0 0.0
  %239 = vmatpush1.msra.mxu0 0.0
  %240 = vmatprep.subr.mxu0 0.0
  %241 = vmatpush1.msra.mxu0 0.0
  %242 = vmatprep.subr.mxu0 0.0
  %243 = vmatpush1.msra.mxu0 0.0
  %244 = vmatprep.subr.mxu0 0.0
  %245 = vmatpush1.msra.mxu0 0.0
  %246 = vmatprep.subr.mxu0 0.0
  %247 = vmatpush1.msra.mxu0 0.0
  %248 = vmatprep.subr.mxu0 0.0
  %249 = vmatpush1.msra.mxu0 %v213
  %250 = vmatprep.subr.mxu0 0.0
  %251 = vmatpush1.msra.mxu0 %v212
  %252 = vmatprep.subr.mxu0 0.0
  %253 = vmatpush2.msra.mxu0 0.0
  %254 = vmatprep.subr.mxu0 0.0
  %255 = vmatpush2.msra.mxu0 0.0
  %256 = vmatprep.subr.mxu0 0.0
  %257 = vmatpush2.msra.mxu0 0.0
  %258 = vmatprep.subr.mxu0 0.0
  %259 = vmatpush2.msra.mxu0 0.0
  %260 = vmatprep.subr.mxu0 0.0
  %261 = vmatpush2.msra.mxu0 0.0
  %262 = vmatprep.subr.mxu0 0.0
  %263 = vmatpush2.msra.mxu0 0.0
  %264 = vmatprep.subr.mxu0 0.0
  %265 = vmatpush2.msra.mxu0 0.0
  %266 = vmatprep.subr.mxu0 0.0
  %267 = vmatpush2.msra.mxu0 0.0
  %268 = vmatprep.subr.mxu0 0.0
  %269 = vmatpush2.msra.mxu0 0.0
  %270 = vmatprep.subr.mxu0 0.0
  %271 = vmatpush2.msra.mxu0 0.0
  %272 = vmatprep.subr.mxu0 0.0
  %273 = vmatpush2.msra.mxu0 0.0
  %274 = vmatprep.subr.mxu0 0.0
  %275 = vmatpush2.msra.mxu0 0.0
  %276 = vmatprep.subr.mxu0 0.0
  %277 = vmatpush2.msra.mxu0 0.0
  %278 = vmatprep.subr.mxu0 0.0
  %279 = vmatpush2.msra.mxu0 0.0
  %280 = vmatprep.subr.mxu0 0.0
  %281 = vmatpush2.msra.mxu0 0.0
  %282 = vmatprep.subr.mxu0 0.0
  %283 = vmatpush2.msra.mxu0 0.0
  %284 = vmatprep.mubr.f32.mxu0 0.0
  %285 = vmatmul.mubr.f32.gmra.mxu0 %v218
  %v286 = vpop.f32.mrf.mxu0
  %v287 = vadd.f32 0.0, %v286
  %v288 = vpop.f32.mrf.mxu0
  %289 = vdwg.mxu0
  %290 = vset.pattern.permute.xlu0 120
  %291 = vperm.xlu0 %290, %v16
  %v292 = vpop.permute.xlu0 %291
  %vm294 = vcmask 1039360
  %v296 = vsel %vm294, %v287, 0
  %vm298 = vcmask 1046528
  %v300 = vsel %vm298, %v29, 0
  %302 = vmatprep.subr.mxu0 0.0
  %303 = vmatpush1.msra.mxu0 %v300
  %304 = vmatprep.subr.mxu0 0.0
  %305 = vmatpush1.msra.mxu0 %v28
  %306 = vmatprep.subr.mxu0 0.0
  %307 = vmatpush1.msra.mxu0 %v27
  %308 = vmatprep.subr.mxu0 0.0
  %309 = vmatpush1.msra.mxu0 %v26
  %310 = vmatprep.subr.mxu0 0.0
  %311 = vmatpush1.msra.mxu0 %v25
  %312 = vmatprep.subr.mxu0 0.0
  %313 = vmatpush1.msra.mxu0 %v24
  %314 = vmatprep.subr.mxu0 0.0
  %315 = vmatpush1.msra.mxu0 %v23
  %316 = vmatprep.subr.mxu0 0.0
  %317 = vmatpush1.msra.mxu0 %v22
  %318 = vmatprep.subr.mxu0 0.0
  %319 = vmatpush1.msra.mxu0 %v21
  %320 = vmatprep.subr.mxu0 0.0
  %321 = vmatpush1.msra.mxu0 %v20
  %322 = vmatprep.subr.mxu0 0.0
  %323 = vmatpush1.msra.mxu0 %v19
  %324 = vmatprep.subr.mxu0 0.0
  %325 = vmatpush1.msra.mxu0 %v18
  %326 = vmatprep.subr.mxu0 0.0
  %327 = vmatpush1.msra.mxu0 %v17
  %328 = vmatprep.subr.mxu0 0.0
  %329 = vmatpush1.msra.mxu0 %v15
  %330 = vmatprep.subr.mxu0 0.0
  %331 = vmatpush1.msra.mxu0 %v14
  %332 = vmatprep.subr.mxu0 0.0
  %333 = vmatpush1.msra.mxu0 %v13
  %334 = vmatprep.subr.mxu0 0.0
  %335 = vmatpush2.msra.mxu0 0.0
  %336 = vmatprep.subr.mxu0 0.0
  %337 = vmatpush2.msra.mxu0 0.0
  %338 = vmatprep.subr.mxu0 0.0
  %339 = vmatpush2.msra.mxu0 0.0
  %340 = vmatprep.subr.mxu0 0.0
  %341 = vmatpush2.msra.mxu0 0.0
  %342 = vmatprep.subr.mxu0 0.0
  %343 = vmatpush2.msra.mxu0 0.0
  %344 = vmatprep.subr.mxu0 0.0
  %345 = vmatpush2.msra.mxu0 0.0
  %346 = vmatprep.subr.mxu0 0.0
  %347 = vmatpush2.msra.mxu0 0.0
  %348 = vmatprep.subr.mxu0 0.0
  %349 = vmatpush2.msra.mxu0 0.0
  %350 = vmatprep.subr.mxu0 0.0
  %351 = vmatpush2.msra.mxu0 0.0
  %352 = vmatprep.subr.mxu0 0.0
  %353 = vmatpush2.msra.mxu0 0.0
  %354 = vmatprep.subr.mxu0 0.0
  %355 = vmatpush2.msra.mxu0 0.0
  %356 = vmatprep.subr.mxu0 0.0
  %357 = vmatpush2.msra.mxu0 0.0
  %358 = vmatprep.subr.mxu0 0.0
  %359 = vmatpush2.msra.mxu0 0.0
  %360 = vmatprep.subr.mxu0 0.0
  %361 = vmatpush2.msra.mxu0 0.0
  %362 = vmatprep.subr.mxu0 0.0
  %363 = vmatpush2.msra.mxu0 0.0
  %364 = vmatprep.subr.mxu0 0.0
  %365 = vmatpush2.msra.mxu0 0.0
  %366 = vmatprep.mubr.f32.mxu0 0.0
  %367 = vmatmul.mubr.f32.gmra.mxu0 %v296
  %v368 = vpop.f32.mrf.mxu0
  %v369 = vadd.f32 %v292, %v368
  %v370 = vpop.f32.mrf.mxu0
  %371 = vdwg.mxu0
  %v372 = vmax.f32 %v369, 0.0
  %378 = vrot.lane.b32.xlu0 %v13, 64
  %v379 = vpop.permute.xlu0 %378
  %380 = vrot.lane.b32.xlu0 %v14, 64
  %v381 = vpop.permute.xlu0 %380
  %382 = vrot.lane.b32.xlu0 %v15, 64
  %v383 = vpop.permute.xlu0 %382
  %384 = vrot.lane.b32.xlu0 %v17, 64
  %v385 = vpop.permute.xlu0 %384
  %386 = vrot.lane.b32.xlu0 %v18, 64
  %v387 = vpop.permute.xlu0 %386
  %388 = vrot.lane.b32.xlu0 %v19, 64
  %v389 = vpop.permute.xlu0 %388
  %390 = vrot.lane.b32.xlu0 %v20, 64
  %v391 = vpop.permute.xlu0 %390
  %392 = vrot.lane.b32.xlu0 %v21, 64
  %v393 = vpop.permute.xlu0 %392
  %403 = vrot.lane.b32.xlu0 %v30, 32
  %v404 = vpop.permute.xlu0 %403
  %vm406 = vcmask 523264
  %v408 = vsel %vm406, %v372, 0
  %410 = vmatprep.subr.mxu0 0.0
  %411 = vmatpush1.msra.mxu0 0.0
  %412 = vmatprep.subr.mxu0 0.0
  %413 = vmatpush1.msra.mxu0 0.0
  %414 = vmatprep.subr.mxu0 0.0
  %415 = vmatpush1.msra.mxu0 0.0
  %416 = vmatprep.subr.mxu0 0.0
  %417 = vmatpush1.msra.mxu0 0.0
  %418 = vmatprep.subr.mxu0 0.0
  %419 = vmatpush1.msra.mxu0 0.0
  %420 = vmatprep.subr.mxu0 0.0
  %421 = vmatpush1.msra.mxu0 0.0
  %422 = vmatprep.subr.mxu0 0.0
  %423 = vmatpush1.msra.mxu0 0.0
  %424 = vmatprep.subr.mxu0 0.0
  %425 = vmatpush1.msra.mxu0 0.0
  %426 = vmatprep.subr.mxu0 0.0
  %427 = vmatpush1.msra.mxu0 %v393
  %428 = vmatprep.subr.mxu0 0.0
  %429 = vmatpush1.msra.mxu0 %v391
  %430 = vmatprep.subr.mxu0 0.0
  %431 = vmatpush1.msra.mxu0 %v389
  %432 = vmatprep.subr.mxu0 0.0
  %433 = vmatpush1.msra.mxu0 %v387
  %434 = vmatprep.subr.mxu0 0.0
  %435 = vmatpush1.msra.mxu0 %v385
  %436 = vmatprep.subr.mxu0 0.0
  %437 = vmatpush1.msra.mxu0 %v383
  %438 = vmatprep.subr.mxu0 0.0
  %439 = vmatpush1.msra.mxu0 %v381
  %440 = vmatprep.subr.mxu0 0.0
  %441 = vmatpush1.msra.mxu0 %v379
  %442 = vmatprep.subr.mxu0 0.0
  %443 = vmatpush2.msra.mxu0 0.0
  %444 = vmatprep.subr.mxu0 0.0
  %445 = vmatpush2.msra.mxu0 0.0
  %446 = vmatprep.subr.mxu0 0.0
  %447 = vmatpush2.msra.mxu0 0.0
  %448 = vmatprep.subr.mxu0 0.0
  %449 = vmatpush2.msra.mxu0 0.0
  %450 = vmatprep.subr.mxu0 0.0
  %451 = vmatpush2.msra.mxu0 0.0
  %452 = vmatprep.subr.mxu0 0.0
  %453 = vmatpush2.msra.mxu0 0.0
  %454 = vmatprep.subr.mxu0 0.0
  %455 = vmatpush2.msra.mxu0 0.0
  %456 = vmatprep.subr.mxu0 0.0
  %457 = vmatpush2.msra.mxu0 0.0
  %458 = vmatprep.subr.mxu0 0.0
  %459 = vmatpush2.msra.mxu0 0.0
  %460 = vmatprep.subr.mxu0 0.0
  %461 = vmatpush2.msra.mxu0 0.0
  %462 = vmatprep.subr.mxu0 0.0
  %463 = vmatpush2.msra.mxu0 0.0
  %464 = vmatprep.subr.mxu0 0.0
  %465 = vmatpush2.msra.mxu0 0.0
  %466 = vmatprep.subr.mxu0 0.0
  %467 = vmatpush2.msra.mxu0 0.0
  %468 = vmatprep.subr.mxu0 0.0
  %469 = vmatpush2.msra.mxu0 0.0
  %470 = vmatprep.subr.mxu0 0.0
  %471 = vmatpush2.msra.mxu0 0.0
  %472 = vmatprep.subr.mxu0 0.0
  %473 = vmatpush2.msra.mxu0 0.0
  %474 = vmatprep.mubr.f32.mxu0 0.0
  %475 = vmatmul.mubr.f32.gmra.mxu0 %v408
  %v476 = vpop.f32.mrf.mxu0
  %v477 = vadd.f32 %v404, %v476
  %v478 = vpop.f32.mrf.mxu0
  %479 = vdwg.mxu0
  %v480 = vmax.f32 %v477, 0.0
  %481 = vrot.lane.b32.xlu0 %v13, 32
  %v482 = vpop.permute.xlu0 %481
  %483 = vrot.lane.b32.xlu0 %v14, 32
  %v484 = vpop.permute.xlu0 %483
  %485 = vrot.lane.b32.xlu0 %v15, 32
  %v486 = vpop.permute.xlu0 %485
  %487 = vrot.lane.b32.xlu0 %v17, 32
  %v488 = vpop.permute.xlu0 %487
  %494 = vrot.lane.b32.xlu0 %v31, 32
  %v495 = vpop.permute.xlu0 %494
  %vm497 = vcmask 261120
  %v499 = vsel %vm497, %v480, 0
  %501 = vmatprep.subr.mxu0 0.0
  %502 = vmatpush1.msra.mxu0 0.0
  %503 = vmatprep.subr.mxu0 0.0
  %504 = vmatpush1.msra.mxu0 0.0
  %505 = vmatprep.subr.mxu0 0.0
  %506 = vmatpush1.msra.mxu0 0.0
  %507 = vmatprep.subr.mxu0 0.0
  %508 = vmatpush1.msra.mxu0 0.0
  %509 = vmatprep.subr.mxu0 0.0
  %510 = vmatpush1.msra.mxu0 0.0
  %511 = vmatprep.subr.mxu0 0.0
  %512 = vmatpush1.msra.mxu0 0.0
  %513 = vmatprep.subr.mxu0 0.0
  %514 = vmatpush1.msra.mxu0 0.0
  %515 = vmatprep.subr.mxu0 0.0
  %516 = vmatpush1.msra.mxu0 0.0
  %517 = vmatprep.subr.mxu0 0.0
  %518 = vmatpush1.msra.mxu0 0.0
  %519 = vmatprep.subr.mxu0 0.0
  %520 = vmatpush1.msra.mxu0 0.0
  %521 = vmatprep.subr.mxu0 0.0
  %522 = vmatpush1.msra.mxu0 0.0
  %523 = vmatprep.subr.mxu0 0.0
  %524 = vmatpush1.msra.mxu0 0.0
  %525 = vmatprep.subr.mxu0 0.0
  %526 = vmatpush1.msra.mxu0 %v488
  %527 = vmatprep.subr.mxu0 0.0
  %528 = vmatpush1.msra.mxu0 %v486
  %529 = vmatprep.subr.mxu0 0.0
  %530 = vmatpush1.msra.mxu0 %v484
  %531 = vmatprep.subr.mxu0 0.0
  %532 = vmatpush1.msra.mxu0 %v482
  %533 = vmatprep.subr.mxu0 0.0
  %534 = vmatpush2.msra.mxu0 0.0
  %535 = vmatprep.subr.mxu0 0.0
  %536 = vmatpush2.msra.mxu0 0.0
  %537 = vmatprep.subr.mxu0 0.0
  %538 = vmatpush2.msra.mxu0 0.0
  %539 = vmatprep.subr.mxu0 0.0
  %540 = vmatpush2.msra.mxu0 0.0
  %541 = vmatprep.subr.mxu0 0.0
  %542 = vmatpush2.msra.mxu0 0.0
  %543 = vmatprep.subr.mxu0 0.0
  %544 = vmatpush2.msra.mxu0 0.0
  %545 = vmatprep.subr.mxu0 0.0
  %546 = vmatpush2.msra.mxu0 0.0
  %547 = vmatprep.subr.mxu0 0.0
  %548 = vmatpush2.msra.mxu0 0.0
  %549 = vmatprep.subr.mxu0 0.0
  %550 = vmatpush2.msra.mxu0 0.0
  %551 = vmatprep.subr.mxu0 0.0
  %552 = vmatpush2.msra.mxu0 0.0
  %553 = vmatprep.subr.mxu0 0.0
  %554 = vmatpush2.msra.mxu0 0.0
  %555 = vmatprep.subr.mxu0 0.0
  %556 = vmatpush2.msra.mxu0 0.0
  %557 = vmatprep.subr.mxu0 0.0
  %558 = vmatpush2.msra.mxu0 0.0
  %559 = vmatprep.subr.mxu0 0.0
  %560 = vmatpush2.msra.mxu0 0.0
  %561 = vmatprep.subr.mxu0 0.0
  %562 = vmatpush2.msra.mxu0 0.0
  %563 = vmatprep.subr.mxu0 0.0
  %564 = vmatpush2.msra.mxu0 0.0
  %565 = vmatprep.mubr.f32.mxu0 0.0
  %566 = vmatmul.mubr.f32.gmra.mxu0 %v499
  %v567 = vpop.f32.mrf.mxu0
  %v568 = vadd.f32 %v495, %v567
  %v569 = vpop.f32.mrf.mxu0
  %570 = vdwg.mxu0
  %vm571 = vcmask 57344
  %572 = vst.msk [vmem:[%s2] sm:$0x1] %vm571, %v568
  // Predicated region
  $region10: #{sliding_predictor.1} parent=0 // pred_check
    _
  $region11: #{sliding_predictor.1} parent=0 // pred_check_branch
    %574 = sbr.rel (0) target = $region13
  $region12: #{sliding_predictor.1} parent=0 // pred_region
    _
  $region13: #{sliding_predictor.1} parent=0 // pred_fallthru
    _
  // Predicated region
  $region14: #{sliding_predictor.1} parent=0 // pred_check
    _
  $region15: #{sliding_predictor.1} parent=0 // pred_check_branch
    %576 = sbr.rel (0) target = $region17
  $region16: #{sliding_predictor.1} parent=0 // pred_region
    _
  $region17: #{sliding_predictor.1} parent=0 // pred_fallthru
    _

</llo_original>
